<compile_context>
chip_gen: v7x
topology: tpu7x:2x2x1
jax: 0.10.0
libtpu: 0.0.40
codegen_flags: <defaults>
</compile_context>

<pallas_src>
import functools

import numpy as np
import jax
import jax.numpy as jnp
from jax import lax
from jax.experimental import pallas as pl
from jax.experimental.pallas import tpu as pltpu


# Deterministic bandwidths, exactly as in the PyTorch __init__.
KERNEL_BANDWIDTHS = tuple(float(b) for b in np.logspace(0, np.log10(128), num=10))
_INV_2BW2 = tuple(1.0 / (2.0 * b * b) for b in KERNEL_BANDWIDTHS)

_LANE = 128
_SUBLANE = 8
_MAX_TILE = 512       # upper bound on the sample-axis tile (multiple of 128)
_NEG_BIG = -1e30      # finite "minus infinity" for masked softmax entries
_POISON = 1e30        # padded-row norm -> distances ~1e30 -> exp == 0.0


def _round_up(x, m):
    return ((x + m - 1) // m) * m


def _stage2_vmem_budget_bytes():
    # Per-grid-step footprint budget for stage 2.  Stay under the *scoped*
    # VMEM defaults of every generation (16 MiB on v5e, 32 MiB on v6e/v7x)
    # and never assume more than ~1/4 of physical VMEM (64 MiB on v7x,
    # 128 MiB on v5e/v6e) so double-buffered pipelining stays alive without
    # vmem_limit_bytes overrides.
    try:
        phys = int(pltpu.get_tpu_info().vmem_capacity_bytes)
    except Exception:
        phys = 64 * 1024 * 1024
    return min(phys // 4, 12 * 1024 * 1024)


def _pick_tile(ns, nt, d_pad, lp_bytes, block_n):
    """Sample-axis tile size, shared by rows and cols (multiple of 128)."""
    if block_n is not None:
        t = int(block_n)
        if t % _LANE != 0:
            raise ValueError("block_n must be a multiple of 128")
        return t
    budget = _stage2_vmem_budget_bytes()
    tile = _MAX_TILE
    while tile > _LANE:
        # 2 operand panels x 2 pipeline buffers + ~6 f32 tile temporaries.
        need = 4 * tile * d_pad * lp_bytes + 6 * tile * tile * 4
        if need <= budget:
            break
        tile -= _LANE
    # Don't tile far past the real sample counts (typical batch x logits use).
    return max(_LANE, min(tile, _round_up(max(ns, nt), _LANE)))


# ---------------------------------------------------------------------------
# Stage 1: log_softmax over features + per-row squared norms (row-tiled).
# ---------------------------------------------------------------------------
def _logsoftmax_norm_kernel(x_ref, lp_ref, norm_ref, *, d_real, n_src,
                            n_src_pad, n_tgt, tile_rows, lp_dtype):
    i = pl.program_id(0)
    x = x_ref[...].astype(jnp.float32)
    feat_ok = lax.broadcasted_iota(jnp.int32, x.shape, 1) < d_real
    xm = jnp.where(feat_ok, x, jnp.float32(_NEG_BIG))   # padded features ignored
    m = jnp.max(xm, axis=1, keepdims=True)
    z = xm - m
    lse = jnp.log(jnp.sum(jnp.exp(z), axis=1, keepdims=True))
    # Zero padded feature columns so they contribute nothing to norms / dots.
    lp = jnp.where(feat_ok, z - lse, 0.0).astype(lp_dtype)
    lp_ref[...] = lp
    # Norms consistent with the *stored* (possibly bf16) log-probs, so the
    # kernel-matrix diagonal stays ~0 after the MXU dot.
    lp_f = lp.astype(jnp.float32)
    nrm = jnp.sum(lp_f * lp_f, axis=1, keepdims=True)
    # Poison padded rows: their pairwise distances become ~1e30 and the RBF
    # exp underflows to exactly 0, so stage 2 needs no validity masks.
    r = i * tile_rows + lax.broadcasted_iota(jnp.int32, nrm.shape, 0)
    row_ok = (r < n_src) | ((r >= n_src_pad) & (r < n_src_pad + n_tgt))
    norm_ref[...] = jnp.where(row_ok, nrm, jnp.float32(_POISON))


def _log_softmax_and_norms(x_pad, d_real, n_src, n_src_pad, n_tgt, tile_rows,
                           lp_dtype):
    n_pad, d_pad = x_pad.shape
    return pl.pallas_call(
        functools.partial(_logsoftmax_norm_kernel, d_real=d_real, n_src=n_src,
                          n_src_pad=n_src_pad, n_tgt=n_tgt,
                          tile_rows=tile_rows, lp_dtype=lp_dtype),
        out_shape=(jax.ShapeDtypeStruct((n_pad, d_pad), lp_dtype),
                   jax.ShapeDtypeStruct((n_pad, 1), jnp.float32)),
        grid=(n_pad // tile_rows,),
        in_specs=[pl.BlockSpec((tile_rows, d_pad), lambda i: (i, 0))],
        out_specs=(pl.BlockSpec((tile_rows, d_pad), lambda i: (i, 0)),
                   pl.BlockSpec((tile_rows, 1), lambda i: (i, 0))),
        compiler_params=pltpu.CompilerParams(dimension_semantics=("parallel",)),
    )(x_pad)


# ---------------------------------------------------------------------------
# Stage 2: fused ss/tt/st bandwidth-summed kernel matrices, upper-triangular
# block enumeration driven by a prefetched (block_i, block_j) table.
# ---------------------------------------------------------------------------
def _pair_sum_kernel(bi_ref, bj_ref, row_lp_ref, row_n_ref, col_lp_ref,
                     col_n_ref, out_ref, *, inv_bw, nb_src, exp_dtype):
    t = pl.program_id(0)

    @pl.when(t == 0)
    def _init():
        out_ref[...] = jnp.zeros_like(out_ref)

    # Contract the last axis of both panels on the MXU (no transpose).
    ab = lax.dot_general(row_lp_ref[...], col_lp_ref[...],
                         (((1,), (1,)), ((), ())),
                         preferred_element_type=jnp.float32)       # (TM, TN)
    d = row_n_ref[...] + col_n_ref[...] - 2.0 * ab                 # hoisted norms
    d = jnp.maximum(d, 0.0)      # exact-math d >= 0; guard f32 cancellation
    # All 10 bandwidths fused while the tile is live.  exp_dtype=bf16 runs the
    # packed-bf16 EUP on v6e/v7x (~2x on the binding slot); the accumulation
    # stays in f32.
    f32_exp = jnp.dtype(exp_dtype) == jnp.dtype(jnp.float32)
    ksum = jnp.zeros_like(d)
    for inv in inv_bw:
        arg = d * jnp.float32(-inv)
        if f32_exp:
            ksum = ksum + jnp.exp(arg)
        else:
            ksum = ksum + jnp.exp(arg.astype(exp_dtype)).astype(jnp.float32)
    # Poisoned (padded) rows/cols contribute exactly 0 -> plain tile sum.
    tile_sum = jnp.sum(ksum)

    # Route the tile into the ss / tt / st accumulator lanes.
    bi = bi_ref[t]
    bj = bj_ref[t]
    is_ss = bj < nb_src          # table guarantees bi <= bj
    is_tt = bi >= nb_src
    kind = jnp.where(is_ss, 0, jnp.where(is_tt, 1, 2)).astype(jnp.int32)
    # Upper-triangular enumeration: symmetric off-diagonal blocks count twice;
    # cross (st) blocks are each enumerated exactly once.
    weight = jnp.where((kind != 2) & (bi != bj),
                       jnp.float32(2.0), jnp.float32(1.0))
    lane = lax.broadcasted_iota(jnp.int32, out_ref.shape, 1)
    out_ref[...] = out_ref[...] + jnp.where(lane == kind, weight * tile_sum, 0.0)


# ---------------------------------------------------------------------------
# Public wrapper (forward pass of the PyTorch MMDLoss module).
# ---------------------------------------------------------------------------
def mmd_loss(source_samples, target_samples, *, block_n=None,
             lp_dtype=jnp.bfloat16, exp_dtype=jnp.bfloat16):
    """MMD loss.  lp_dtype: storage dtype of the log-probs fed to the MXU
    (bf16 halves HBM traffic / VMEM blocks; jnp.float32 for exact math).
    exp_dtype: dtype of the RBF exp (bf16 -> packed-bf16 EUP on v6e/v7x;
    pass jnp.float32 on v5e or when tight f32 accuracy is required)."""
    ns, dim = source_samples.shape
    nt, dim2 = target_samples.shape
    assert dim == dim2, "source/target feature dims must match"

    d_pad = _round_up(dim, _LANE)
    lp_bytes = jnp.dtype(lp_dtype).itemsize
    tile = _pick_tile(ns, nt, d_pad, lp_bytes, block_n)

    nsp = _round_up(ns, tile)
    ntp = _round_up(nt, tile)
    n_pad = nsp + ntp

    # Concatenate [source; target] with tile-aligned region boundaries so one
    # symmetric upper-triangular pass covers ss, tt and st at once.
    xs = jnp.pad(source_samples.astype(jnp.float32),
                 ((0, nsp - ns), (0, d_pad - dim)))
    xt = jnp.pad(target_samples.astype(jnp.float32),
                 ((0, ntp - nt), (0, d_pad - dim)))
    x_all = jnp.concatenate([xs, xt], axis=0)

    # Stage 1: log_softmax + squared norms (computed once, reused everywhere).
    lp, norms = _log_softmax_and_norms(x_all, dim, ns, nsp, nt, tile, lp_dtype)
    norms_row = norms.reshape(1, n_pad)   # lane-dense copy for the column side

    # Upper-triangular block-pair table, prefetched to SMEM (P2 pattern):
    # skipped lower blocks are never enumerated -> no dead DMA / step overhead.
    nb_src = nsp // tile
    nb = n_pad // tile
    pairs = [(i, j) for i in range(nb) for j in range(i, nb)]
    bi_arr = jnp.asarray([p[0] for p in pairs], dtype=jnp.int32)
    bj_arr = jnp.asarray([p[1] for p in pairs], dtype=jnp.int32)
    n_steps = len(pairs)

    n_bw = len(_INV_2BW2)
    cost = pl.CostEstimate(
        flops=int(n_steps * (2 * tile * tile * d_pad
                             + (4 + 2 * n_bw) * tile * tile)),
        transcendentals=int(n_steps * n_bw * tile * tile),
        bytes_accessed=int(n_steps * (2 * tile * d_pad * lp_bytes + 2 * tile * 4)
                           + _LANE * 4),
    )

    grid_spec = pltpu.PrefetchScalarGridSpec(
        num_scalar_prefetch=2,
        grid=(n_steps,),
        in_specs=[
            pl.BlockSpec((tile, d_pad), lambda t, bi, bj: (bi[t], 0)),  # row lp
            pl.BlockSpec((tile, 1), lambda t, bi, bj: (bi[t], 0)),      # row ||.||^2
            pl.BlockSpec((tile, d_pad), lambda t, bi, bj: (bj[t], 0)),  # col lp
            pl.BlockSpec((1, tile), lambda t, bi, bj: (0, bj[t])),      # col ||.||^2
        ],
        out_specs=pl.BlockSpec((1, _LANE), lambda t, bi, bj: (0, 0)),
    )

    sums = pl.pallas_call(
        functools.partial(_pair_sum_kernel, inv_bw=_INV_2BW2, nb_src=nb_src,
                          exp_dtype=exp_dtype),
        out_shape=jax.ShapeDtypeStruct((1, _LANE), jnp.float32),
        grid_spec=grid_spec,
        compiler_params=pltpu.CompilerParams(
            dimension_semantics=("arbitrary",)),
        cost_estimate=cost,
    )(bi_arr, bj_arr, lp, norms, lp, norms_row)

    sum_ss = sums[0, 0]
    sum_tt = sums[0, 1]
    sum_st = sums[0, 2]
    k = float(len(KERNEL_BANDWIDTHS))
    return (sum_ss / (ns * ns) + sum_tt / (nt * nt)
            - 2.0 * sum_st / (ns * nt)) / k


# ---------------------------------------------------------------------------
# Pure-JAX reference mirroring the PyTorch module (for the self-check).
# ---------------------------------------------------------------------------
def mmd_loss_ref(source_samples, target_samples):
    s_lp = jax.nn.log_softmax(source_samples.astype(jnp.float32), axis=1)
    t_lp = jax.nn.log_softmax(target_samples.astype(jnp.float32), axis=1)

    def rbf(x, y, bw):
        xx = jnp.sum(x ** 2, axis=1, keepdims=True)
        yy = jnp.sum(y ** 2, axis=1, keepdims=True)
        xy = x @ y.T
        d2 = xx - 2 * xy + yy.T
        return jnp.exp(-d2 / (2 * bw ** 2))

    mmds = [jnp.mean(rbf(s_lp, s_lp, b)) + jnp.mean(rbf(t_lp, t_lp, b))
            - 2 * jnp.mean(rbf(s_lp, t_lp, b)) for b in KERNEL_BANDWIDTHS]
    return jnp.mean(jnp.stack(mmds))


if __name__ == "__main__":
    key = jax.random.PRNGKey(0)
    k1, k2, k3, k4 = jax.random.split(key, 4)

    # Case 1: small (batch x logits), same as the module's typical usage.
    ns, d = 8, 32
    src = jax.random.normal(k1, (ns, d), dtype=jnp.float32)
    tgt = jax.random.normal(k2, (ns, d), dtype=jnp.float32) + 0.5
    ref = jax.block_until_ready(mmd_loss_ref(src, tgt))

    # Exact-math path (f32 log-probs + f32 exp): validates the fused
    # triangular enumeration / routing / padding / norm poisoning tightly.
    out_exact = jax.block_until_ready(
        mmd_loss(src, tgt, lp_dtype=jnp.float32, exp_dtype=jnp.float32))
    assert jnp.isfinite(out_exact), "exact path produced non-finite result"
    assert jnp.allclose(out_exact, ref, rtol=1e-4, atol=5e-5), (out_exact, ref)

    # Fast path (bf16 log-probs into the MXU + bf16 EUP exp): loose tolerance
    # accounts for the reduced-precision representation only.
    out_fast = jax.block_until_ready(mmd_loss(src, tgt))
    assert jnp.isfinite(out_fast), "fast path produced non-finite result"
    assert jnp.allclose(out_fast, ref, rtol=5e-2, atol=1e-2), (out_fast, ref)

    # Case 2: unequal sample counts + unaligned D; block_n=128 forces a 4x4
    # block triangle (3 ss + 3 tt + 4 st tiles) exercising multi-block
    # accumulation, padded-row poisoning and the 2x symmetric-block weights.
    ns2, nt2, d2_ = 200, 150, 40
    src2 = jax.random.normal(k3, (ns2, d2_), dtype=jnp.float32)
    tgt2 = 0.3 * jax.random.normal(k4, (nt2, d2_), dtype=jnp.float32) + 0.1
    ref2 = jax.block_until_ready(mmd_loss_ref(src2, tgt2))

    out2_exact = jax.block_until_ready(
        mmd_loss(src2, tgt2, block_n=128,
                 lp_dtype=jnp.float32, exp_dtype=jnp.float32))
    assert jnp.isfinite(out2_exact), "exact path produced non-finite result"
    assert jnp.allclose(out2_exact, ref2, rtol=1e-4, atol=5e-5), (out2_exact, ref2)

    # Fast path with the automatic VMEM-aware tile picker.
    out2_fast = jax.block_until_ready(mmd_loss(src2, tgt2))
    assert jnp.isfinite(out2_fast), "fast path produced non-finite result"
    assert jnp.allclose(out2_fast, ref2, rtol=5e-2, atol=1e-2), (out2_fast, ref2)

    print("KERNEL_OK")
</pallas_src>

<mosaic_0001>
module attributes {stable_mosaic.version = 11 : i64} {
  func.func @_logsoftmax_norm_kernel(%arg0: i32, %arg1: memref<128x128xf32, #tpu.memory_space<vmem>>, %arg2: memref<128x128xf32, #tpu.memory_space<vmem>>, %arg3: memref<128x1xf32, #tpu.memory_space<vmem>>) attributes {dimension_semantics = [#tpu.dimension_semantics<parallel>], iteration_bounds = array<i64: 2>, scalar_prefetch = 0 : i64, scratch_operands = 0 : i64, tpu.core_type = #tpu.core_type<tc>, window_params = [{transform_indices = @transform_0, window_bounds = array<i64: 128, 128>}, {transform_indices = @transform_1, window_bounds = array<i64: 128, 128>}, {transform_indices = @transform_2, window_bounds = array<i64: 128, 1>}]} {
    %c0 = arith.constant 0 : index
    %c0_0 = arith.constant 0 : index
    %0 = vector.load %arg1[%c0, %c0_0] : memref<128x128xf32, #tpu.memory_space<vmem>>, vector<128x128xf32>
    %1 = tpu.iota {dimensions = array<i32: 1>} : vector<128x128xi32>
    %c32_i32 = arith.constant 32 : i32
    %2 = vector.broadcast %c32_i32 : i32 to vector<128x128xi32>
    %3 = arith.cmpi slt, %1, %2 : vector<128x128xi32>
    %cst = arith.constant -1.000000e+30 : f32
    %4 = vector.broadcast %cst : f32 to vector<128x128xf32>
    %5 = arith.select %3, %0, %4 : vector<128x128xi1>, vector<128x128xf32>
    %cst_1 = arith.constant dense<0xFF800000> : vector<128xf32>
    %6 = vector.multi_reduction <maximumf>, %5, %cst_1 [1] : vector<128x128xf32> to vector<128xf32>
    %7 = vector.shape_cast %6 : vector<128xf32> to vector<128x1xf32>
    %8 = vector.broadcast %7 : vector<128x1xf32> to vector<128x128xf32>
    %9 = arith.subf %5, %8 : vector<128x128xf32>
    %10 = math.exp %9 : vector<128x128xf32>
    %cst_2 = arith.constant dense<0.000000e+00> : vector<128xf32>
    %11 = vector.multi_reduction <add>, %10, %cst_2 [1] : vector<128x128xf32> to vector<128xf32>
    %12 = vector.shape_cast %11 : vector<128xf32> to vector<128x1xf32>
    %13 = math.log %12 : vector<128x1xf32>
    %14 = vector.broadcast %13 : vector<128x1xf32> to vector<128x128xf32>
    %15 = arith.subf %9, %14 : vector<128x128xf32>
    %cst_3 = arith.constant 0.000000e+00 : f32
    %16 = vector.broadcast %cst_3 : f32 to vector<128x128xf32>
    %17 = arith.select %3, %15, %16 : vector<128x128xi1>, vector<128x128xf32>
    %c0_4 = arith.constant 0 : index
    %c0_5 = arith.constant 0 : index
    %18 = vector.load %arg2[%c0_4, %c0_5] : memref<128x128xf32, #tpu.memory_space<vmem>>, vector<128x128xf32>
    tpu.vector_store %arg2[%c0_4, %c0_5], %17 {strides = array<i32>} : memref<128x128xf32, #tpu.memory_space<vmem>>, vector<128x128xf32>,
    %19 = arith.mulf %17, %17 : vector<128x128xf32>
    %cst_6 = arith.constant dense<0.000000e+00> : vector<128xf32>
    %20 = vector.multi_reduction <add>, %19, %cst_6 [1] : vector<128x128xf32> to vector<128xf32>
    %21 = vector.shape_cast %20 : vector<128xf32> to vector<128x1xf32>
    %c128_i32 = arith.constant 128 : i32
    %22 = arith.muli %arg0, %c128_i32 : i32
    %23 = tpu.iota {dimensions = array<i32: 0>} : vector<128x1xi32>
    %24 = vector.broadcast %22 : i32 to vector<128x1xi32>
    %25 = arith.addi %24, %23 : vector<128x1xi32>
    %c8_i32 = arith.constant 8 : i32
    %26 = vector.broadcast %c8_i32 : i32 to vector<128x1xi32>
    %27 = arith.cmpi slt, %25, %26 : vector<128x1xi32>
    %c128_i32_7 = arith.constant 128 : i32
    %28 = vector.broadcast %c128_i32_7 : i32 to vector<128x1xi32>
    %29 = arith.cmpi sge, %25, %28 : vector<128x1xi32>
    %c136_i32 = arith.constant 136 : i32
    %30 = vector.broadcast %c136_i32 : i32 to vector<128x1xi32>
    %31 = arith.cmpi slt, %25, %30 : vector<128x1xi32>
    %32 = arith.andi %29, %31 : vector<128x1xi1>
    %33 = arith.ori %27, %32 : vector<128x1xi1>
    %cst_8 = arith.constant 1.000000e+30 : f32
    %34 = vector.broadcast %cst_8 : f32 to vector<128x1xf32>
    %35 = arith.select %33, %21, %34 : vector<128x1xi1>, vector<128x1xf32>
    %c0_9 = arith.constant 0 : index
    %c0_10 = arith.constant 0 : index
    %36 = vector.load %arg3[%c0_9, %c0_10] : memref<128x1xf32, #tpu.memory_space<vmem>>, vector<128x1xf32>
    tpu.vector_store %arg3[%c0_9, %c0_10], %35 {strides = array<i32>} : memref<128x1xf32, #tpu.memory_space<vmem>>, vector<128x1xf32>,
    return
  }
  func.func @transform_0(%arg0: i32) -> (i32, i32) {
    %c0_i32 = arith.constant 0 : i32
    %c0_i32_0 = arith.constant 0 : i32
    return %arg0, %c0_i32 : i32, i32
  }
  func.func @transform_1(%arg0: i32) -> (i32, i32) {
    %c0_i32 = arith.constant 0 : i32
    %c0_i32_0 = arith.constant 0 : i32
    return %arg0, %c0_i32 : i32, i32
  }
  func.func @transform_2(%arg0: i32) -> (i32, i32) {
    %c0_i32 = arith.constant 0 : i32
    %c0_i32_0 = arith.constant 0 : i32
    return %arg0, %c0_i32 : i32, i32
  }
}

</mosaic_0001>

<llo_original>
// kernel: tpu_custom_call.1
$region0: #{tpu_custom_call.1}
  #allocation0 [shape = 'u32[]', space=smem, size = 0x4, offset = 0x4, fixed_abs, tag = 'smem constant byte address 0x4 - core index']
  #allocation1 [shape = 'u32[144,128]{1,0:T(1,128)}', space=vmem, size = 0x12000, scoped, tag = 'internal scratch']
  %s0 = inlined_call_operand.hbm [shape: f32[256,128], index: 0, kind: input, shape index: {}]
  %s1 = inlined_call_operand.hbm [shape: f32[256,128], index: 1, kind: output, shape index: {0}]
  %s2 = inlined_call_operand.vmem [shape: f32[256,1], index: 2, kind: output, shape index: {1}]
  %3 = xla_tuple %s1, %s2
  %s4 = sld [smem:[#allocation0]]
  $region49: #{tpu_custom_call.1} parent=0
    _
  %s6 = ssub.s32 1, %s4
  %s7 = scalar_select 0, %s6, %s4
  $region1: #{tpu_custom_call.1} parent=0
    #allocation2 [shape = 'u8[131072]{0}', space=vmem, size = 0x20000, scoped, tag = 'input window, operand 0']
    #allocation3 [shape = 's32[2]{0}', space=sflag, size = 0x8, scoped, tag = 'scoped memory for tpu_custom_call.1']
    #allocation4 [shape = 's32[2]{0}', space=sflag, size = 0x8, scoped, tag = 'scoped memory for tpu_custom_call.1']
    #allocation5 [shape = 'u8[131072]{0}', space=vmem, size = 0x20000, scoped, tag = 'output window, operand 0']
    %8 = vsyncpa [#allocation3], 0
    %s9 = scalar_lea.sflag [#allocation3], 1
    %10 = vsyncpa %s9, 0
    %11 = vsyncpa [#allocation4], 0
    %s12 = scalar_lea.sflag [#allocation4], 1
    %13 = vsyncpa %s12, 0
    loop: start=0, step=1, limit=4
    $region2: #{tpu_custom_call.1} parent=1 // loop_pre_header
      _
    $region3: #{tpu_custom_call.1} parent=1 // loop_header
      %s15 = sphi 0, %s19
      %p16 = scmp.ge.s32.totalorder %s15, 4
      %s25 = sphi 0, %s27
      %s28 = sphi 0, %s25
      %s29 = sphi 0, %s28
      %s45 = sphi 0, %s29
      %s51 = sphi 0, %s53
      %s54 = sphi 0, %s51
      %s55 = sphi 0, %s54
      %s71 = sphi 0, %s55
      %s77 = sphi 0, %s79
      %s80 = sphi 0, %s77
      %s81 = sphi 0, %s80
      %s97 = sphi 0, %s81
    $region4: #{tpu_custom_call.1} parent=1 // loop_header_branch
      %18 = sbr.rel (%p16) target = $region8
    $region5: #{tpu_custom_call.1} parent=1 // loop_body
      %s20 = ssub.s32 %s15, 1
      %s21 = ssub.s32 %s15, 2
      %s22 = sadd.s32 %s15, 1
      %s23 = ssub.s32 %s15, %s22
      %p24 = scmp.eq.s32.totalorder %s23, 0
      %s26 = sadd.s32 %s25, 1
      %s27 = scalar_select %p24, %s25, %s26
      %p30 = pneg %p24
      %p31 = scmp.eq.s32.totalorder %s15, 1
      %p32 = por %p30, %p31
      %p33 = scmp.ne.s32.totalorder %s25, %s28
      %p34 = scmp.eq.s32.totalorder %s15, 0
      %p35 = por %p33, %p34
      %p36 = scmp.ne.s32.totalorder %s25, %s28
      %p37 = scmp.eq.s32.totalorder %s20, 1
      %p38 = por %p36, %p37
      %p39 = scmp.ne.s32.totalorder %s28, %s29
      %p40 = scmp.eq.s32.totalorder %s20, 0
      %p41 = por %p39, %p40
      %p42 = scmp.ne.s32.totalorder %s28, %s29
      %p43 = scmp.eq.s32.totalorder %s21, 1
      %p44 = por %p42, %p43
      %p46 = scmp.ne.s32.totalorder %s29, %s45
      %p47 = scmp.eq.s32.totalorder %s21, 0
      %p48 = por %p46, %p47
      %s49 = ssub.s32 %s15, %s22
      %p50 = scmp.eq.s32.totalorder %s49, 0
      %s52 = sadd.s32 %s51, 1
      %s53 = scalar_select %p50, %s51, %s52
      %p56 = pneg %p50
      %p57 = scmp.eq.s32.totalorder %s15, 1
      %p58 = por %p56, %p57
      %p59 = scmp.ne.s32.totalorder %s51, %s54
      %p60 = scmp.eq.s32.totalorder %s15, 0
      %p61 = por %p59, %p60
      %p62 = scmp.ne.s32.totalorder %s51, %s54
      %p63 = scmp.eq.s32.totalorder %s20, 1
      %p64 = por %p62, %p63
      %p65 = scmp.ne.s32.totalorder %s54, %s55
      %p66 = scmp.eq.s32.totalorder %s20, 0
      %p67 = por %p65, %p66
      %p68 = scmp.ne.s32.totalorder %s54, %s55
      %p69 = scmp.eq.s32.totalorder %s21, 1
      %p70 = por %p68, %p69
      %p72 = scmp.ne.s32.totalorder %s55, %s71
      %p73 = scmp.eq.s32.totalorder %s21, 0
      %p74 = por %p72, %p73
      %s75 = ssub.s32 %s15, %s22
      %p76 = scmp.eq.s32.totalorder %s75, 0
      %s78 = sadd.s32 %s77, 1
      %s79 = scalar_select %p76, %s77, %s78
      %p82 = pneg %p76
      %p83 = scmp.eq.s32.totalorder %s15, 1
      %p84 = por %p82, %p83
      %p85 = scmp.ne.s32.totalorder %s77, %s80
      %p86 = scmp.eq.s32.totalorder %s15, 0
      %p87 = por %p85, %p86
      %p88 = scmp.ne.s32.totalorder %s77, %s80
      %p89 = scmp.eq.s32.totalorder %s20, 1
      %p90 = por %p88, %p89
      %p91 = scmp.ne.s32.totalorder %s80, %s81
      %p92 = scmp.eq.s32.totalorder %s20, 0
      %p93 = por %p91, %p92
      %p94 = scmp.ne.s32.totalorder %s80, %s81
      %p95 = scmp.eq.s32.totalorder %s21, 1
      %p96 = por %p94, %p95
      %p98 = scmp.ne.s32.totalorder %s81, %s97
      %p99 = scmp.eq.s32.totalorder %s21, 0
      %p100 = por %p98, %p99
      %p101 = scmp.le.s32.totalorder 1, %s15
      %p102 = scmp.lt.s32.totalorder %s15, 3
      %p103 = pnand %p101, %p102
      %p104 = pneg %p103
      // Predicated region
      $region9: #{tpu_custom_call.1} parent=5 // pred_check
        _
      $region10: #{tpu_custom_call.1} parent=5 // pred_check_branch
        %106 = sbr.rel (%p103) target = $region12
      $region11: #{tpu_custom_call.1} parent=5 // pred_region
        %s107 = ssub.s32 %s15, 1
      $region12: #{tpu_custom_call.1} parent=5 // pred_fallthru
        _
      %p108 = scmp.lt.s32.totalorder %s15, 2
      // Predicated region
      $region13: #{tpu_custom_call.1} parent=5 // pred_check
        %p109 = pneg %p108
      $region14: #{tpu_custom_call.1} parent=5 // pred_check_branch
        %111 = sbr.rel (%p109) target = $region16
      $region15: #{tpu_custom_call.1} parent=5 // pred_region
        // Predicated region
        $region17: #{tpu_custom_call.1} parent=15 // pred_check
          %p112 = pneg %p35
        $region18: #{tpu_custom_call.1} parent=15 // pred_check_branch
          %114 = sbr.rel (%p112) target = $region20
        $region19: #{tpu_custom_call.1} parent=15 // pred_region
          %s115 = sand.u32 %s25, 1
          %s116 = scalar_lea.sflag [#allocation3], %s115
          %s117 = sand.u32 %s25, 1
          %s118 = smul.addr %s117, 128
          %s119 = scalar_lea.vmem [#allocation2], %s118
          %s120 = smul.u32 16, %s15
          %s122 = ssub.s32 2048, 2048
          %123 = vsyncadd %s116, %s122
          %s124 = smul.addr %s120, 128
          %s125 = scalar_lea.hbm %s0, %s124
          %s126 = sshll.u32 %s119, 4
          %s127 = int_to_ptr.vmem [resolvable:$true] %s126
          %132 = dma.hbm_to_vmem [thread:$0]  %s125, 2048, %s127, %s116, 128, 128, 8
        $region20: #{tpu_custom_call.1} parent=15 // pred_fallthru
          _
      $region16: #{tpu_custom_call.1} parent=5 // pred_fallthru
        _
      %p133 = scmp.le.s32.totalorder 1, %s15
      %p134 = scmp.lt.s32.totalorder %s15, 3
      %p135 = pnand %p133, %p134
      %p136 = pneg %p135
      // Predicated region
      $region21: #{tpu_custom_call.1} parent=5 // pred_check
        _
      $region22: #{tpu_custom_call.1} parent=5 // pred_check_branch
        %138 = sbr.rel (%p135) target = $region24
      $region23: #{tpu_custom_call.1} parent=5 // pred_region
        %s139 = ssub.s32 %s15, 1
        %s140 = sand.u32 %s28, 1
        %s141 = scalar_lea.sflag [#allocation3], %s140
        %s142 = sand.u32 %s28, 1
        %s143 = smul.addr %s142, 128
        %s144 = scalar_lea.vmem [#allocation2], %s143
        // Predicated region
        $region25: #{tpu_custom_call.1} parent=23 // pred_check
          %p145 = pneg %p41
        $region26: #{tpu_custom_call.1} parent=23 // pred_check_branch
          %147 = sbr.rel (%p145) target = $region28
        $region27: #{tpu_custom_call.1} parent=23 // pred_region
          %148 = dma.done %s141, 2048
        $region28: #{tpu_custom_call.1} parent=23 // pred_fallthru
          _
        %s149 = sand.u32 %s28, 1
        %s150 = scalar_lea.sflag [#allocation3], %s149
        %s151 = sand.u32 %s28, 1
        %s152 = smul.addr %s151, 128
        %s153 = scalar_lea.vmem [#allocation2], %s152
        %p154 = pneg %p41
        %p155 = pneg %p38
        %p156 = pneg %p67
        %p157 = pneg %p64
        %s158 = sand.u32 %s54, 1
        %s159 = scalar_lea.sflag [#allocation4], %s158
        %s160 = sand.u32 %s54, 1
        %s161 = smul.addr %s160, 128
        %s162 = scalar_lea.vmem [#allocation5], %s161
        %p163 = pneg %p93
        %p164 = pneg %p90
        %s165 = smul.u32 16, %s20
        %p166 = scmp.lt.s32.totalorder %s165, 31
        %s167 = scalar_select %p166, %s165, 31
        %s168 = smul.addr %s167, 8
        %s169 = scalar_lea.vmem %s2, %s168
        %s170 = smul.u32 16, %s20
        %s171 = smul.u32 16, %s20
        %s172 = smul.u32 16, %s20
        %p173 = scmp.lt.s32.totalorder %s172, 31
        %s174 = scalar_select %p173, %s172, 31
        %s175 = smul.addr %s174, 8
        %s176 = scalar_lea.vmem %s2, %s175
        %s177 = smul.u32 16, %s20
        %v178 = vld [vmem:[%s144] sm:$0xff]
        %v179 = vld [vmem:[%s144 + $0x8] sm:$0xff]
        %v180 = vld [vmem:[%s144 + $0x10] sm:$0xff]
        %v181 = vld [vmem:[%s144 + $0x18] sm:$0xff]
        %v182 = vld [vmem:[%s144 + $0x20] sm:$0xff]
        %v183 = vld [vmem:[%s144 + $0x28] sm:$0xff]
        %v184 = vld [vmem:[%s144 + $0x30] sm:$0xff]
        %v185 = vld [vmem:[%s144 + $0x38] sm:$0xff]
        %v186 = vld [vmem:[%s144 + $0x40] sm:$0xff]
        %v187 = vld [vmem:[%s144 + $0x48] sm:$0xff]
        %v188 = vld [vmem:[%s144 + $0x50] sm:$0xff]
        %v189 = vld [vmem:[%s144 + $0x58] sm:$0xff]
        %v190 = vld [vmem:[%s144 + $0x60] sm:$0xff]
        %v191 = vld [vmem:[%s144 + $0x68] sm:$0xff]
        %v192 = vld [vmem:[%s144 + $0x70] sm:$0xff]
        %v193 = vld [vmem:[%s144 + $0x78] sm:$0xff]
        %v194 = vlaneseq
        %v195 = vand.u32 %v194, 127
        %vm196 = vcmp.lt.s32.totalorder %v195, 32
        %v197 = vsel %vm196, %v178, -1e+30
        %v198 = vsel %vm196, %v179, -1e+30
        %v199 = vsel %vm196, %v180, -1e+30
        %v200 = vsel %vm196, %v181, -1e+30
        %v201 = vsel %vm196, %v182, -1e+30
        %v202 = vsel %vm196, %v183, -1e+30
        %v203 = vsel %vm196, %v184, -1e+30
        %v204 = vsel %vm196, %v185, -1e+30
        %v205 = vsel %vm196, %v186, -1e+30
        %v206 = vsel %vm196, %v187, -1e+30
        %v207 = vsel %vm196, %v188, -1e+30
        %v208 = vsel %vm196, %v189, -1e+30
        %v209 = vsel %vm196, %v190, -1e+30
        %v210 = vsel %vm196, %v191, -1e+30
        %v211 = vsel %vm196, %v192, -1e+30
        %v212 = vsel %vm196, %v193, -1e+30
        %213 = vmax.xlane.f32.xlu0 %v197
        %v214 = vpop.xlane.xlu0 %213
        %215 = vmax.xlane.f32.xlu0 %v198
        %v216 = vpop.xlane.xlu0 %215
        %217 = vmax.xlane.f32.xlu0 %v199
        %v218 = vpop.xlane.xlu0 %217
        %219 = vmax.xlane.f32.xlu0 %v200
        %v220 = vpop.xlane.xlu0 %219
        %221 = vmax.xlane.f32.xlu0 %v201
        %v222 = vpop.xlane.xlu0 %221
        %223 = vmax.xlane.f32.xlu0 %v202
        %v224 = vpop.xlane.xlu0 %223
        %225 = vmax.xlane.f32.xlu0 %v203
        %v226 = vpop.xlane.xlu0 %225
        %227 = vmax.xlane.f32.xlu0 %v204
        %v228 = vpop.xlane.xlu0 %227
        %229 = vmax.xlane.f32.xlu0 %v205
        %v230 = vpop.xlane.xlu0 %229
        %231 = vmax.xlane.f32.xlu0 %v206
        %v232 = vpop.xlane.xlu0 %231
        %233 = vmax.xlane.f32.xlu0 %v207
        %v234 = vpop.xlane.xlu0 %233
        %235 = vmax.xlane.f32.xlu0 %v208
        %v236 = vpop.xlane.xlu0 %235
        %237 = vmax.xlane.f32.xlu0 %v209
        %v238 = vpop.xlane.xlu0 %237
        %239 = vmax.xlane.f32.xlu0 %v210
        %v240 = vpop.xlane.xlu0 %239
        %241 = vmax.xlane.f32.xlu0 %v211
        %v242 = vpop.xlane.xlu0 %241
        %243 = vmax.xlane.f32.xlu0 %v212
        %v244 = vpop.xlane.xlu0 %243
        %v245 = vsub.f32 %v197, %v214
        %v246 = vsub.f32 %v198, %v216
        %v247 = vsub.f32 %v199, %v218
        %v248 = vsub.f32 %v200, %v220
        %v249 = vsub.f32 %v201, %v222
        %v250 = vsub.f32 %v202, %v224
        %v251 = vsub.f32 %v203, %v226
        %v252 = vsub.f32 %v204, %v228
        %v253 = vsub.f32 %v205, %v230
        %v254 = vsub.f32 %v206, %v232
        %v255 = vsub.f32 %v207, %v234
        %v256 = vsub.f32 %v208, %v236
        %v257 = vsub.f32 %v209, %v238
        %v258 = vsub.f32 %v210, %v240
        %v259 = vsub.f32 %v211, %v242
        %v260 = vsub.f32 %v212, %v244
        %v261 = vmul.f32 %v245, 1.442695
        %v262 = vpow.pop %v261
        %v263 = vmul.f32 %v246, 1.442695
        %v264 = vpow.pop %v263
        %v265 = vmul.f32 %v247, 1.442695
        %v266 = vpow.pop %v265
        %v267 = vmul.f32 %v248, 1.442695
        %v268 = vpow.pop %v267
        %v269 = vmul.f32 %v249, 1.442695
        %v270 = vpow.pop %v269
        %v271 = vmul.f32 %v250, 1.442695
        %v272 = vpow.pop %v271
        %v273 = vmul.f32 %v251, 1.442695
        %v274 = vpow.pop %v273
        %v275 = vmul.f32 %v252, 1.442695
        %v276 = vpow.pop %v275
        %v277 = vmul.f32 %v253, 1.442695
        %v278 = vpow.pop %v277
        %v279 = vmul.f32 %v254, 1.442695
        %v280 = vpow.pop %v279
        %v281 = vmul.f32 %v255, 1.442695
        %v282 = vpow.pop %v281
        %v283 = vmul.f32 %v256, 1.442695
        %v284 = vpow.pop %v283
        %v285 = vmul.f32 %v257, 1.442695
        %v286 = vpow.pop %v285
        %v287 = vmul.f32 %v258, 1.442695
        %v288 = vpow.pop %v287
        %v289 = vmul.f32 %v259, 1.442695
        %v290 = vpow.pop %v289
        %v291 = vmul.f32 %v260, 1.442695
        %v292 = vpow.pop %v291
        %293 = vadd.xlane.f32.xlu0 %v262
        %v294 = vpop.xlane.xlu0 %293
        %295 = vadd.xlane.f32.xlu0 %v264
        %v296 = vpop.xlane.xlu0 %295
        %297 = vadd.xlane.f32.xlu0 %v266
        %v298 = vpop.xlane.xlu0 %297
        %299 = vadd.xlane.f32.xlu0 %v268
        %v300 = vpop.xlane.xlu0 %299
        %301 = vadd.xlane.f32.xlu0 %v270
        %v302 = vpop.xlane.xlu0 %301
        %303 = vadd.xlane.f32.xlu0 %v272
        %v304 = vpop.xlane.xlu0 %303
        %305 = vadd.xlane.f32.xlu0 %v274
        %v306 = vpop.xlane.xlu0 %305
        %307 = vadd.xlane.f32.xlu0 %v276
        %v308 = vpop.xlane.xlu0 %307
        %309 = vadd.xlane.f32.xlu0 %v278
        %v310 = vpop.xlane.xlu0 %309
        %311 = vadd.xlane.f32.xlu0 %v280
        %v312 = vpop.xlane.xlu0 %311
        %313 = vadd.xlane.f32.xlu0 %v282
        %v314 = vpop.xlane.xlu0 %313
        %315 = vadd.xlane.f32.xlu0 %v284
        %v316 = vpop.xlane.xlu0 %315
        %317 = vadd.xlane.f32.xlu0 %v286
        %v318 = vpop.xlane.xlu0 %317
        %319 = vadd.xlane.f32.xlu0 %v288
        %v320 = vpop.xlane.xlu0 %319
        %321 = vadd.xlane.f32.xlu0 %v290
        %v322 = vpop.xlane.xlu0 %321
        %323 = vadd.xlane.f32.xlu0 %v292
        %v324 = vpop.xlane.xlu0 %323
        %v325 = vlog2.pop %v294
        %v326 = vmul.f32 %v325, 0.6931472
        %v327 = vlog2.pop %v296
        %v328 = vmul.f32 %v327, 0.6931472
        %v329 = vlog2.pop %v298
        %v330 = vmul.f32 %v329, 0.6931472
        %v331 = vlog2.pop %v300
        %v332 = vmul.f32 %v331, 0.6931472
        %v333 = vlog2.pop %v302
        %v334 = vmul.f32 %v333, 0.6931472
        %v335 = vlog2.pop %v304
        %v336 = vmul.f32 %v335, 0.6931472
        %v337 = vlog2.pop %v306
        %v338 = vmul.f32 %v337, 0.6931472
        %v339 = vlog2.pop %v308
        %v340 = vmul.f32 %v339, 0.6931472
        %v341 = vlog2.pop %v310
        %v342 = vmul.f32 %v341, 0.6931472
        %v343 = vlog2.pop %v312
        %v344 = vmul.f32 %v343, 0.6931472
        %v345 = vlog2.pop %v314
        %v346 = vmul.f32 %v345, 0.6931472
        %v347 = vlog2.pop %v316
        %v348 = vmul.f32 %v347, 0.6931472
        %v349 = vlog2.pop %v318
        %v350 = vmul.f32 %v349, 0.6931472
        %v351 = vlog2.pop %v320
        %v352 = vmul.f32 %v351, 0.6931472
        %v353 = vlog2.pop %v322
        %v354 = vmul.f32 %v353, 0.6931472
        %v355 = vlog2.pop %v324
        %v356 = vmul.f32 %v355, 0.6931472
        %v357 = vsub.f32 %v245, %v326
        %v358 = vsub.f32 %v246, %v328
        %v359 = vsub.f32 %v247, %v330
        %v360 = vsub.f32 %v248, %v332
        %v361 = vsub.f32 %v249, %v334
        %v362 = vsub.f32 %v250, %v336
        %v363 = vsub.f32 %v251, %v338
        %v364 = vsub.f32 %v252, %v340
        %v365 = vsub.f32 %v253, %v342
        %v366 = vsub.f32 %v254, %v344
        %v367 = vsub.f32 %v255, %v346
        %v368 = vsub.f32 %v256, %v348
        %v369 = vsub.f32 %v257, %v350
        %v370 = vsub.f32 %v258, %v352
        %v371 = vsub.f32 %v259, %v354
        %v372 = vsub.f32 %v260, %v356
        %v373 = vsel %vm196, %v357, 0.0
        %v374 = vsel %vm196, %v358, 0.0
        %v375 = vsel %vm196, %v359, 0.0
        %v376 = vsel %vm196, %v360, 0.0
        %v377 = vsel %vm196, %v361, 0.0
        %v378 = vsel %vm196, %v362, 0.0
        %v379 = vsel %vm196, %v363, 0.0
        %v380 = vsel %vm196, %v364, 0.0
        %v381 = vsel %vm196, %v365, 0.0
        %v382 = vsel %vm196, %v366, 0.0
        %v383 = vsel %vm196, %v367, 0.0
        %v384 = vsel %vm196, %v368, 0.0
        %v385 = vsel %vm196, %v369, 0.0
        %v386 = vsel %vm196, %v370, 0.0
        %v387 = vsel %vm196, %v371, 0.0
        %v388 = vsel %vm196, %v372, 0.0
        %389 = vst [vmem:[%s162] sm:$0xff] %v373
        %390 = vst [vmem:[%s162 + $0x8] sm:$0xff] %v374
        %391 = vst [vmem:[%s162 + $0x10] sm:$0xff] %v375
        %392 = vst [vmem:[%s162 + $0x18] sm:$0xff] %v376
        %393 = vst [vmem:[%s162 + $0x20] sm:$0xff] %v377
        %394 = vst [vmem:[%s162 + $0x28] sm:$0xff] %v378
        %395 = vst [vmem:[%s162 + $0x30] sm:$0xff] %v379
        %396 = vst [vmem:[%s162 + $0x38] sm:$0xff] %v380
        %397 = vst [vmem:[%s162 + $0x40] sm:$0xff] %v381
        %398 = vst [vmem:[%s162 + $0x48] sm:$0xff] %v382
        %399 = vst [vmem:[%s162 + $0x50] sm:$0xff] %v383
        %400 = vst [vmem:[%s162 + $0x58] sm:$0xff] %v384
        %401 = vst [vmem:[%s162 + $0x60] sm:$0xff] %v385
        %402 = vst [vmem:[%s162 + $0x68] sm:$0xff] %v386
        %403 = vst [vmem:[%s162 + $0x70] sm:$0xff] %v387
        %404 = vst [vmem:[%s162 + $0x78] sm:$0xff] %v388
        %v405 = vmul.f32 %v373, %v373
        %v406 = vmul.f32 %v374, %v374
        %v407 = vmul.f32 %v375, %v375
        %v408 = vmul.f32 %v376, %v376
        %v409 = vmul.f32 %v377, %v377
        %v410 = vmul.f32 %v378, %v378
        %v411 = vmul.f32 %v379, %v379
        %v412 = vmul.f32 %v380, %v380
        %v413 = vmul.f32 %v381, %v381
        %v414 = vmul.f32 %v382, %v382
        %v415 = vmul.f32 %v383, %v383
        %v416 = vmul.f32 %v384, %v384
        %v417 = vmul.f32 %v385, %v385
        %v418 = vmul.f32 %v386, %v386
        %v419 = vmul.f32 %v387, %v387
        %v420 = vmul.f32 %v388, %v388
        %421 = vadd.xlane.f32.xlu0 %v405
        %v422 = vpop.xlane.xlu0 %421
        %423 = vadd.xlane.f32.xlu0 %v406
        %v424 = vpop.xlane.xlu0 %423
        %425 = vadd.xlane.f32.xlu0 %v407
        %v426 = vpop.xlane.xlu0 %425
        %427 = vadd.xlane.f32.xlu0 %v408
        %v428 = vpop.xlane.xlu0 %427
        %429 = vadd.xlane.f32.xlu0 %v409
        %v430 = vpop.xlane.xlu0 %429
        %431 = vadd.xlane.f32.xlu0 %v410
        %v432 = vpop.xlane.xlu0 %431
        %433 = vadd.xlane.f32.xlu0 %v411
        %v434 = vpop.xlane.xlu0 %433
        %435 = vadd.xlane.f32.xlu0 %v412
        %v436 = vpop.xlane.xlu0 %435
        %437 = vadd.xlane.f32.xlu0 %v413
        %v438 = vpop.xlane.xlu0 %437
        %439 = vadd.xlane.f32.xlu0 %v414
        %v440 = vpop.xlane.xlu0 %439
        %441 = vadd.xlane.f32.xlu0 %v415
        %v442 = vpop.xlane.xlu0 %441
        %443 = vadd.xlane.f32.xlu0 %v416
        %v444 = vpop.xlane.xlu0 %443
        %445 = vadd.xlane.f32.xlu0 %v417
        %v446 = vpop.xlane.xlu0 %445
        %447 = vadd.xlane.f32.xlu0 %v418
        %v448 = vpop.xlane.xlu0 %447
        %449 = vadd.xlane.f32.xlu0 %v419
        %v450 = vpop.xlane.xlu0 %449
        %451 = vadd.xlane.f32.xlu0 %v420
        %v452 = vpop.xlane.xlu0 %451
        %s453 = smul.u32 %s20, 128
        %v454 = vlaneseq
        %v455 = vshrl.u32 %v454, 7
        %v456 = vadd.s32 %v455, 8
        %v457 = vadd.s32 %v455, 16
        %v458 = vadd.s32 %v455, 24
        %v459 = vadd.s32 %v455, 32
        %v460 = vadd.s32 %v455, 40
        %v461 = vadd.s32 %v455, 48
        %v462 = vadd.s32 %v455, 56
        %v463 = vadd.s32 %v455, 64
        %v464 = vadd.s32 %v455, 72
        %v465 = vadd.s32 %v455, 80
        %v466 = vadd.s32 %v455, 88
        %v467 = vadd.s32 %v455, 96
        %v468 = vadd.s32 %v455, 104
        %v469 = vadd.s32 %v455, 112
        %v470 = vadd.s32 %v455, 120
        %v471 = vstv %s453
        %v472 = vadd.s32 %v471, %v455
        %v473 = vadd.s32 %v471, %v456
        %v474 = vadd.s32 %v471, %v457
        %v475 = vadd.s32 %v471, %v458
        %v476 = vadd.s32 %v471, %v459
        %v477 = vadd.s32 %v471, %v460
        %v478 = vadd.s32 %v471, %v461
        %v479 = vadd.s32 %v471, %v462
        %v480 = vadd.s32 %v471, %v463
        %v481 = vadd.s32 %v471, %v464
        %v482 = vadd.s32 %v471, %v465
        %v483 = vadd.s32 %v471, %v466
        %v484 = vadd.s32 %v471, %v467
        %v485 = vadd.s32 %v471, %v468
        %v486 = vadd.s32 %v471, %v469
        %v487 = vadd.s32 %v471, %v470
        %vm488 = vcmp.lt.s32.totalorder %v472, 8
        %vm489 = vcmp.lt.s32.totalorder %v473, 8
        %vm490 = vcmp.lt.s32.totalorder %v474, 8
        %vm491 = vcmp.lt.s32.totalorder %v475, 8
        %vm492 = vcmp.lt.s32.totalorder %v476, 8
        %vm493 = vcmp.lt.s32.totalorder %v477, 8
        %vm494 = vcmp.lt.s32.totalorder %v478, 8
        %vm495 = vcmp.lt.s32.totalorder %v479, 8
        %vm496 = vcmp.lt.s32.totalorder %v480, 8
        %vm497 = vcmp.lt.s32.totalorder %v481, 8
        %vm498 = vcmp.lt.s32.totalorder %v482, 8
        %vm499 = vcmp.lt.s32.totalorder %v483, 8
        %vm500 = vcmp.lt.s32.totalorder %v484, 8
        %vm501 = vcmp.lt.s32.totalorder %v485, 8
        %vm502 = vcmp.lt.s32.totalorder %v486, 8
        %vm503 = vcmp.lt.s32.totalorder %v487, 8
        %vm504 = vcmp.ge.s32.totalorder %v472, 128
        %vm505 = vcmp.ge.s32.totalorder %v473, 128
        %vm506 = vcmp.ge.s32.totalorder %v474, 128
        %vm507 = vcmp.ge.s32.totalorder %v475, 128
        %vm508 = vcmp.ge.s32.totalorder %v476, 128
        %vm509 = vcmp.ge.s32.totalorder %v477, 128
        %vm510 = vcmp.ge.s32.totalorder %v478, 128
        %vm511 = vcmp.ge.s32.totalorder %v479, 128
        %vm512 = vcmp.ge.s32.totalorder %v480, 128
        %vm513 = vcmp.ge.s32.totalorder %v481, 128
        %vm514 = vcmp.ge.s32.totalorder %v482, 128
        %vm515 = vcmp.ge.s32.totalorder %v483, 128
        %vm516 = vcmp.ge.s32.totalorder %v484, 128
        %vm517 = vcmp.ge.s32.totalorder %v485, 128
        %vm518 = vcmp.ge.s32.totalorder %v486, 128
        %vm519 = vcmp.ge.s32.totalorder %v487, 128
        %vm520 = vcmp.lt.s32.totalorder %v472, 136
        %vm521 = vcmp.lt.s32.totalorder %v473, 136
        %vm522 = vcmp.lt.s32.totalorder %v474, 136
        %vm523 = vcmp.lt.s32.totalorder %v475, 136
        %vm524 = vcmp.lt.s32.totalorder %v476, 136
        %vm525 = vcmp.lt.s32.totalorder %v477, 136
        %vm526 = vcmp.lt.s32.totalorder %v478, 136
        %vm527 = vcmp.lt.s32.totalorder %v479, 136
        %vm528 = vcmp.lt.s32.totalorder %v480, 136
        %vm529 = vcmp.lt.s32.totalorder %v481, 136
        %vm530 = vcmp.lt.s32.totalorder %v482, 136
        %vm531 = vcmp.lt.s32.totalorder %v483, 136
        %vm532 = vcmp.lt.s32.totalorder %v484, 136
        %vm533 = vcmp.lt.s32.totalorder %v485, 136
        %vm534 = vcmp.lt.s32.totalorder %v486, 136
        %vm535 = vcmp.lt.s32.totalorder %v487, 136
        %vm536 = vmand %vm504, %vm520
        %vm537 = vmand %vm505, %vm521
        %vm538 = vmand %vm506, %vm522
        %vm539 = vmand %vm507, %vm523
        %vm540 = vmand %vm508, %vm524
        %vm541 = vmand %vm509, %vm525
        %vm542 = vmand %vm510, %vm526
        %vm543 = vmand %vm511, %vm527
        %vm544 = vmand %vm512, %vm528
        %vm545 = vmand %vm513, %vm529
        %vm546 = vmand %vm514, %vm530
        %vm547 = vmand %vm515, %vm531
        %vm548 = vmand %vm516, %vm532
        %vm549 = vmand %vm517, %vm533
        %vm550 = vmand %vm518, %vm534
        %vm551 = vmand %vm519, %vm535
        %vm552 = vmor %vm488, %vm536
        %vm553 = vmor %vm489, %vm537
        %vm554 = vmor %vm490, %vm538
        %vm555 = vmor %vm491, %vm539
        %vm556 = vmor %vm492, %vm540
        %vm557 = vmor %vm493, %vm541
        %vm558 = vmor %vm494, %vm542
        %vm559 = vmor %vm495, %vm543
        %vm560 = vmor %vm496, %vm544
        %vm561 = vmor %vm497, %vm545
        %vm562 = vmor %vm498, %vm546
        %vm563 = vmor %vm499, %vm547
        %vm564 = vmor %vm500, %vm548
        %vm565 = vmor %vm501, %vm549
        %vm566 = vmor %vm502, %vm550
        %vm567 = vmor %vm503, %vm551
        %v568 = vsel %vm552, %v422, 1e+30
        %v569 = vsel %vm553, %v424, 1e+30
        %v570 = vsel %vm554, %v426, 1e+30
        %v571 = vsel %vm555, %v428, 1e+30
        %v572 = vsel %vm556, %v430, 1e+30
        %v573 = vsel %vm557, %v432, 1e+30
        %v574 = vsel %vm558, %v434, 1e+30
        %v575 = vsel %vm559, %v436, 1e+30
        %v576 = vsel %vm560, %v438, 1e+30
        %v577 = vsel %vm561, %v440, 1e+30
        %v578 = vsel %vm562, %v442, 1e+30
        %v579 = vsel %vm563, %v444, 1e+30
        %v580 = vsel %vm564, %v446, 1e+30
        %v581 = vsel %vm565, %v448, 1e+30
        %v582 = vsel %vm566, %v450, 1e+30
        %v583 = vsel %vm567, %v452, 1e+30
        %vm584 = vcmask 7168
        %585 = vst.msk [vmem:[%s176] sm:$0xff] %vm584, %v568
        %586 = vst.msk [vmem:[%s176 + $0x8] sm:$0xff] %vm584, %v569
        %587 = vst.msk [vmem:[%s176 + $0x10] sm:$0xff] %vm584, %v570
        %588 = vst.msk [vmem:[%s176 + $0x18] sm:$0xff] %vm584, %v571
        %589 = vst.msk [vmem:[%s176 + $0x20] sm:$0xff] %vm584, %v572
        %590 = vst.msk [vmem:[%s176 + $0x28] sm:$0xff] %vm584, %v573
        %591 = vst.msk [vmem:[%s176 + $0x30] sm:$0xff] %vm584, %v574
        %592 = vst.msk [vmem:[%s176 + $0x38] sm:$0xff] %vm584, %v575
        %593 = vst.msk [vmem:[%s176 + $0x40] sm:$0xff] %vm584, %v576
        %594 = vst.msk [vmem:[%s176 + $0x48] sm:$0xff] %vm584, %v577
        %595 = vst.msk [vmem:[%s176 + $0x50] sm:$0xff] %vm584, %v578
        %596 = vst.msk [vmem:[%s176 + $0x58] sm:$0xff] %vm584, %v579
        %597 = vst.msk [vmem:[%s176 + $0x60] sm:$0xff] %vm584, %v580
        %598 = vst.msk [vmem:[%s176 + $0x68] sm:$0xff] %vm584, %v581
        %599 = vst.msk [vmem:[%s176 + $0x70] sm:$0xff] %vm584, %v582
        %600 = vst.msk [vmem:[%s176 + $0x78] sm:$0xff] %vm584, %v583
        %s601 = sand.u32 %s54, 1
        %s602 = scalar_lea.sflag [#allocation4], %s601
        %s603 = sand.u32 %s54, 1
        %s604 = smul.addr %s603, 128
        %s605 = scalar_lea.vmem [#allocation5], %s604
        %s606 = smul.u32 16, %s20
        %p607 = scmp.lt.s32.totalorder %s606, 31
        %s608 = scalar_select %p607, %s606, 31
        %s609 = smul.addr %s608, 8
        %s610 = scalar_lea.vmem %s2, %s609
        // Predicated region
        $region29: #{tpu_custom_call.1} parent=23 // pred_check
          %p611 = pneg %p64
        $region30: #{tpu_custom_call.1} parent=23 // pred_check_branch
          %613 = sbr.rel (%p611) target = $region32
        $region31: #{tpu_custom_call.1} parent=23 // pred_region
          %s614 = smul.u32 16, %s20
          %s616 = ssub.s32 2048, 2048
          %617 = vsyncadd %s602, %s616
          %s618 = smul.addr %s614, 128
          %s619 = scalar_lea.hbm %s1, %s618
          %s620 = sshll.u32 %s605, 4
          %s621 = int_to_ptr.vmem [resolvable:$true] %s620
          %626 = dma.vmem_to_hbm [thread:$0]  %s621, 2048, %s619, %s602, 128, 128, 8
        $region32: #{tpu_custom_call.1} parent=23 // pred_fallthru
          _
        // Predicated region
        $region33: #{tpu_custom_call.1} parent=23 // pred_check
          %p627 = pneg %p90
        $region34: #{tpu_custom_call.1} parent=23 // pred_check_branch
          %629 = sbr.rel (%p627) target = $region36
        $region35: #{tpu_custom_call.1} parent=23 // pred_region
          %s630 = smul.u32 16, %s20
        $region36: #{tpu_custom_call.1} parent=23 // pred_fallthru
          _
      $region24: #{tpu_custom_call.1} parent=5 // pred_fallthru
        _
      %p631 = scmp.le.s32.totalorder 2, %s15
      // Predicated region
      $region37: #{tpu_custom_call.1} parent=5 // pred_check
        %p632 = pneg %p631
      $region38: #{tpu_custom_call.1} parent=5 // pred_check_branch
        %634 = sbr.rel (%p632) target = $region40
      $region39: #{tpu_custom_call.1} parent=5 // pred_region
        %s635 = ssub.s32 %s15, 2
        // Predicated region
        $region41: #{tpu_custom_call.1} parent=39 // pred_check
          %p636 = pneg %p70
        $region42: #{tpu_custom_call.1} parent=39 // pred_check_branch
          %638 = sbr.rel (%p636) target = $region44
        $region43: #{tpu_custom_call.1} parent=39 // pred_region
          %s639 = sand.u32 %s55, 1
          %s640 = scalar_lea.sflag [#allocation4], %s639
          %s641 = sand.u32 %s55, 1
          %s642 = smul.addr %s641, 128
          %s643 = scalar_lea.vmem [#allocation5], %s642
          %644 = dma.done %s640, 2048
        $region44: #{tpu_custom_call.1} parent=39 // pred_fallthru
          _
        // Predicated region
        $region45: #{tpu_custom_call.1} parent=39 // pred_check
          %p645 = pneg %p96
        $region46: #{tpu_custom_call.1} parent=39 // pred_check_branch
          %647 = sbr.rel (%p645) target = $region48
        $region47: #{tpu_custom_call.1} parent=39 // pred_region
          %s648 = smul.u32 16, %s21
          %p649 = scmp.lt.s32.totalorder %s648, 31
          %s650 = scalar_select %p649, %s648, 31
          %s651 = smul.addr %s650, 8
          %s652 = scalar_lea.vmem %s2, %s651
        $region48: #{tpu_custom_call.1} parent=39 // pred_fallthru
          _
      $region40: #{tpu_custom_call.1} parent=5 // pred_fallthru
        _
    $region6: #{tpu_custom_call.1} parent=1 // loop_footer
      %s19 = sadd.s32 1, %s15
    $region7: #{tpu_custom_call.1} parent=1 // loop_footer_branch
      %14 = sbr.rel target = $region3
    $region8: #{tpu_custom_call.1} parent=1 // loop_exit
      _
    %653 = vsyncpa [#allocation3], 1
    %s654 = scalar_lea.sflag [#allocation3], 1
    %655 = vsyncpa %s654, 1
    %656 = vsyncpa [#allocation4], 1
    %s657 = scalar_lea.sflag [#allocation4], 1
    %658 = vsyncpa %s657, 1

</llo_original>
